<compile_context>
chip_gen: v5e
topology: v5e:2x2
jax: 0.10.0
libtpu: 0.0.40
codegen_flags: <defaults>
</compile_context>

<pallas_src>
from functools import partial

import jax
import jax.numpy as jnp
from jax.experimental import pallas as pl
from jax.experimental.pallas import tpu as pltpu

D_MODEL = 512
D_HIDDEN = 256
NUM_SPEAKERS = 2
N_PAD = 128          # lane-dense padded output width (>= num_speakers, multiple of 128)
TM_DEFAULT = 512     # row tile (multiple of 8; fits comfortably in VMEM on v5e/v6e/v7x)


def _round_up(x, m):
    return ((x + m - 1) // m) * m


def _speaker_classifier_kernel(x_ref, w1_ref, b1_ref, w2_ref, b2_ref, o_ref):
    # x_ref: (TM, 512) f32 tile of encoder hidden states.
    # Cast to bf16 in-kernel: VPU work with huge slack in a mem-bound kernel, and it removes
    # a separate wrapper-side cast pass over HBM.
    x = x_ref[...].astype(jnp.bfloat16)
    # Linear(512 -> 256): bf16 MXU matmul with f32 accumulation, bias + ReLU in f32.
    h = jnp.dot(x, w1_ref[...], preferred_element_type=jnp.float32) + b1_ref[...]
    h = jnp.maximum(h, 0.0)
    # Dropout(0.1): identity at inference time.
    # Linear(256 -> num_speakers), zero-padded to 128 output lanes (lane-dense store).
    logits = jnp.dot(h.astype(jnp.bfloat16), w2_ref[...],
                     preferred_element_type=jnp.float32) + b2_ref[...]
    # bf16 writeback halves output HBM traffic; f32 accumulation already happened above.
    o_ref[...] = logits.astype(o_ref.dtype)


def prepare_classifier_params(w1, b1, w2, b2):
    """One-time prep: bf16 matmul weights, f32 biases, layer-2 zero-padded to 128 lanes."""
    ns = w2.shape[1]
    assert ns <= N_PAD
    w1_bf = w1.astype(jnp.bfloat16)
    b1_f32 = b1.reshape(1, D_HIDDEN).astype(jnp.float32)
    w2_pad = jnp.zeros((D_HIDDEN, N_PAD), jnp.bfloat16).at[:, :ns].set(
        w2.astype(jnp.bfloat16))
    b2_pad = jnp.zeros((1, N_PAD), jnp.float32).at[:, :ns].set(
        b2.reshape(1, ns).astype(jnp.float32))
    return w1_bf, b1_f32, w2_pad, b2_pad


@partial(jax.jit, static_argnames=("num_speakers",))
def speaker_classifier_pallas(hidden, w1_bf, b1_f32, w2_pad, b2_pad,
                              *, num_speakers=NUM_SPEAKERS):
    """hidden: [B, T, 512] (f32) -> speaker_logits: [B, T, num_speakers] (f32)."""
    B, T, D = hidden.shape
    assert D == D_MODEL

    M = B * T
    # Keep the tile a multiple of 8 (sublane) but never wildly larger than M.
    tm = min(TM_DEFAULT, _round_up(M, 8))
    grid = (pl.cdiv(M, tm),)

    # Flatten rows; no M padding (Pallas handles the partial trailing block, OOB rows dropped).
    x = hidden.reshape(M, D)

    cost = pl.CostEstimate(
        flops=2 * M * (D_MODEL * D_HIDDEN + D_HIDDEN * N_PAD),
        transcendentals=0,
        bytes_accessed=(M * D_MODEL * x.dtype.itemsize          # activations read
                        + M * N_PAD * 2                          # bf16 logits written
                        + D_MODEL * D_HIDDEN * 2                 # W1 bf16
                        + D_HIDDEN * N_PAD * 2                   # W2 bf16
                        + D_HIDDEN * 4 + N_PAD * 4),             # biases f32
    )

    out = pl.pallas_call(
        _speaker_classifier_kernel,
        out_shape=jax.ShapeDtypeStruct((M, N_PAD), jnp.bfloat16),
        grid_spec=pltpu.PrefetchScalarGridSpec(
            num_scalar_prefetch=0,
            grid=grid,
            in_specs=[
                pl.BlockSpec((tm, D_MODEL), lambda i: (i, 0)),        # x tile (f32)
                pl.BlockSpec((D_MODEL, D_HIDDEN), lambda i: (0, 0)),  # W1 (resident)
                pl.BlockSpec((1, D_HIDDEN), lambda i: (0, 0)),        # b1 (resident)
                pl.BlockSpec((D_HIDDEN, N_PAD), lambda i: (0, 0)),    # W2 padded (resident)
                pl.BlockSpec((1, N_PAD), lambda i: (0, 0)),           # b2 padded (resident)
            ],
            out_specs=pl.BlockSpec((tm, N_PAD), lambda i: (i, 0)),
        ),
        compiler_params=pltpu.CompilerParams(
            dimension_semantics=("parallel",),   # row tiles independent -> megacore on v7x
        ),
        cost_estimate=cost,
    )(x, w1_bf, b1_f32, w2_pad, b2_pad)

    # Strip the lane padding of the output slab; return f32 logits like the reference module.
    return out[:, :num_speakers].astype(jnp.float32).reshape(B, T, num_speakers)


def init_params(key, num_speakers=NUM_SPEAKERS):
    """Deterministic init mimicking torch.nn.Linear default (U[-1/sqrt(fan_in), 1/sqrt(fan_in)])."""
    k1, k2, k3, k4 = jax.random.split(key, 4)
    bound1 = 1.0 / jnp.sqrt(jnp.float32(D_MODEL))
    bound2 = 1.0 / jnp.sqrt(jnp.float32(D_HIDDEN))
    w1 = jax.random.uniform(k1, (D_MODEL, D_HIDDEN), jnp.float32, -bound1, bound1)
    b1 = jax.random.uniform(k2, (1, D_HIDDEN), jnp.float32, -bound1, bound1)
    w2 = jax.random.uniform(k3, (D_HIDDEN, num_speakers), jnp.float32, -bound2, bound2)
    b2 = jax.random.uniform(k4, (1, num_speakers), jnp.float32, -bound2, bound2)
    return w1, b1, w2, b2


def diarization_forward(last_hidden_state, prepared_params, num_speakers=NUM_SPEAKERS):
    """Mirrors DiarizationModel.forward given the whisper encoder output."""
    w1_bf, b1_f32, w2_pad, b2_pad = prepared_params
    speaker_logits = speaker_classifier_pallas(
        last_hidden_state, w1_bf, b1_f32, w2_pad, b2_pad, num_speakers=num_speakers)
    return {
        "encoder_outputs": {"last_hidden_state": last_hidden_state},
        "speaker_logits": speaker_logits,
    }


def _reference(hidden, params):
    """Reference with the same bf16 rounding of matmul operands / output as the kernel."""
    w1, b1, w2, b2 = params
    xb = hidden.astype(jnp.bfloat16).astype(jnp.float32)
    w1b = w1.astype(jnp.bfloat16).astype(jnp.float32)
    w2b = w2.astype(jnp.bfloat16).astype(jnp.float32)
    h = jnp.maximum(xb @ w1b + b1[0], 0.0)
    h = h.astype(jnp.bfloat16).astype(jnp.float32)
    out = h @ w2b + b2[0]
    return out.astype(jnp.bfloat16).astype(jnp.float32)


if __name__ == "__main__":
    key = jax.random.PRNGKey(0)
    k_hid, k_param = jax.random.split(key)

    B, T = 2, 8  # small shapes; D=512 is fixed by the module (Linear(512, 256))
    # Stand-in for whisper.encoder(input_features, attention_mask).last_hidden_state
    # TODO(synk): replace with a real Whisper encoder output when one is available.
    last_hidden_state = jax.random.normal(k_hid, (B, T, D_MODEL), jnp.float32)

    params = init_params(k_param, NUM_SPEAKERS)
    prepared = prepare_classifier_params(*params)   # one-time weight cast + lane padding

    out = diarization_forward(last_hidden_state, prepared, NUM_SPEAKERS)
    speaker_logits = jax.block_until_ready(out["speaker_logits"])

    ref = _reference(last_hidden_state, params)
    assert speaker_logits.shape == (B, T, NUM_SPEAKERS)
    assert jnp.allclose(speaker_logits, ref, atol=2e-2, rtol=2e-2)

    print("KERNEL_OK")
</pallas_src>

<mosaic_0001>
module attributes {stable_mosaic.version = 11 : i64} {
  func.func @_speaker_classifier_kernel(%arg0: i32, %arg1: memref<16x512xf32, #tpu.memory_space<vmem>>, %arg2: memref<512x256xbf16, #tpu.memory_space<vmem>>, %arg3: memref<1x256xf32, #tpu.memory_space<vmem>>, %arg4: memref<256x128xbf16, #tpu.memory_space<vmem>>, %arg5: memref<1x128xf32, #tpu.memory_space<vmem>>, %arg6: memref<16x128xbf16, #tpu.memory_space<vmem>>) attributes {dimension_semantics = [#tpu.dimension_semantics<parallel>], iteration_bounds = array<i64: 1>, scalar_prefetch = 0 : i64, scratch_operands = 0 : i64, tpu.core_type = #tpu.core_type<tc>, window_params = [{transform_indices = @transform_0, window_bounds = array<i64: 16, 512>}, {pipeline_mode = #tpu.pipeline_mode<synchronous>, transform_indices = @transform_1, window_bounds = array<i64: 512, 256>}, {pipeline_mode = #tpu.pipeline_mode<synchronous>, transform_indices = @transform_2, window_bounds = array<i64: 1, 256>}, {pipeline_mode = #tpu.pipeline_mode<synchronous>, transform_indices = @transform_3, window_bounds = array<i64: 256, 128>}, {pipeline_mode = #tpu.pipeline_mode<synchronous>, transform_indices = @transform_4, window_bounds = array<i64: 1, 128>}, {transform_indices = @transform_5, window_bounds = array<i64: 16, 128>}]} {
    %c0 = arith.constant 0 : index
    %c0_0 = arith.constant 0 : index
    %0 = vector.load %arg1[%c0, %c0_0] : memref<16x512xf32, #tpu.memory_space<vmem>>, vector<16x512xf32>
    %1 = arith.truncf %0 : vector<16x512xf32> to vector<16x512xbf16>
    %c0_1 = arith.constant 0 : index
    %c0_2 = arith.constant 0 : index
    %2 = vector.load %arg2[%c0_1, %c0_2] : memref<512x256xbf16, #tpu.memory_space<vmem>>, vector<512x256xbf16>
    %cst = arith.constant dense<0.000000e+00> : vector<16x256xf32>
    %3 = tpu.matmul %1, %2, %cst {dimension_numbers = #tpu.dot_dimension_numbers<[1], [0], [0], [1], [0, 0, 1, 1], [], []>} : vector<16x512xbf16>, vector<512x256xbf16>, vector<16x256xf32> -> vector<16x256xf32>
    %c0_3 = arith.constant 0 : index
    %c0_4 = arith.constant 0 : index
    %4 = vector.load %arg3[%c0_3, %c0_4] : memref<1x256xf32, #tpu.memory_space<vmem>>, vector<1x256xf32>
    %5 = vector.broadcast %4 : vector<1x256xf32> to vector<16x256xf32>
    %6 = arith.addf %3, %5 : vector<16x256xf32>
    %cst_5 = arith.constant 0.000000e+00 : f32
    %7 = vector.broadcast %cst_5 : f32 to vector<16x256xf32>
    %8 = arith.maximumf %6, %7 : vector<16x256xf32>
    %9 = arith.truncf %8 : vector<16x256xf32> to vector<16x256xbf16>
    %c0_6 = arith.constant 0 : index
    %c0_7 = arith.constant 0 : index
    %10 = vector.load %arg4[%c0_6, %c0_7] : memref<256x128xbf16, #tpu.memory_space<vmem>>, vector<256x128xbf16>
    %cst_8 = arith.constant dense<0.000000e+00> : vector<16x128xf32>
    %11 = tpu.matmul %9, %10, %cst_8 {dimension_numbers = #tpu.dot_dimension_numbers<[1], [0], [0], [1], [0, 0, 1, 1], [], []>} : vector<16x256xbf16>, vector<256x128xbf16>, vector<16x128xf32> -> vector<16x128xf32>
    %c0_9 = arith.constant 0 : index
    %c0_10 = arith.constant 0 : index
    %12 = vector.load %arg5[%c0_9, %c0_10] : memref<1x128xf32, #tpu.memory_space<vmem>>, vector<1x128xf32>
    %13 = vector.broadcast %12 : vector<1x128xf32> to vector<16x128xf32>
    %14 = arith.addf %11, %13 : vector<16x128xf32>
    %15 = arith.truncf %14 : vector<16x128xf32> to vector<16x128xbf16>
    %c0_11 = arith.constant 0 : index
    %c0_12 = arith.constant 0 : index
    %16 = vector.load %arg6[%c0_11, %c0_12] : memref<16x128xbf16, #tpu.memory_space<vmem>>, vector<16x128xbf16>
    tpu.vector_store %arg6[%c0_11, %c0_12], %15 {strides = array<i32>} : memref<16x128xbf16, #tpu.memory_space<vmem>>, vector<16x128xbf16>,
    return
  }
  func.func @transform_0(%arg0: i32) -> (i32, i32) {
    %c0_i32 = arith.constant 0 : i32
    %c0_i32_0 = arith.constant 0 : i32
    return %arg0, %c0_i32 : i32, i32
  }
  func.func @transform_1(%arg0: i32) -> (i32, i32) {
    %c0_i32 = arith.constant 0 : i32
    %c0_i32_0 = arith.constant 0 : i32
    %c0_i32_1 = arith.constant 0 : i32
    return %c0_i32, %c0_i32_0 : i32, i32
  }
  func.func @transform_2(%arg0: i32) -> (i32, i32) {
    %c0_i32 = arith.constant 0 : i32
    %c0_i32_0 = arith.constant 0 : i32
    %c0_i32_1 = arith.constant 0 : i32
    return %c0_i32, %c0_i32_0 : i32, i32
  }
  func.func @transform_3(%arg0: i32) -> (i32, i32) {
    %c0_i32 = arith.constant 0 : i32
    %c0_i32_0 = arith.constant 0 : i32
    %c0_i32_1 = arith.constant 0 : i32
    return %c0_i32, %c0_i32_0 : i32, i32
  }
  func.func @transform_4(%arg0: i32) -> (i32, i32) {
    %c0_i32 = arith.constant 0 : i32
    %c0_i32_0 = arith.constant 0 : i32
    %c0_i32_1 = arith.constant 0 : i32
    return %c0_i32, %c0_i32_0 : i32, i32
  }
  func.func @transform_5(%arg0: i32) -> (i32, i32) {
    %c0_i32 = arith.constant 0 : i32
    %c0_i32_0 = arith.constant 0 : i32
    return %arg0, %c0_i32 : i32, i32
  }
}

</mosaic_0001>

<llo_original>
// kernel: speaker_classifier_pallas.1
$region0: #{speaker_classifier_pallas.1}
  #allocation0 [shape = 'u32[]', space=smem, size = 0x4, offset = 0x4, fixed_abs, tag = 'smem constant byte address 0x4 - core index']
  #allocation1 [shape = 'u32[72,128]{1,0:T(1,128)}', space=vmem, size = 0x9000, scoped, tag = 'internal scratch']
  %s0 = inlined_call_operand.hbm [shape: f32[16,512], index: 0, kind: input, shape index: {}]
  %s1 = inlined_call_operand.hbm [shape: bf16[512,256], index: 1, kind: input, shape index: {}]
  %s2 = inlined_call_operand.vmem [shape: f32[1,256], index: 2, kind: input, shape index: {}]
  %s3 = inlined_call_operand.hbm [shape: bf16[256,128], index: 3, kind: input, shape index: {}]
  %s4 = inlined_call_operand.vmem [shape: f32[1,128], index: 4, kind: input, shape index: {}]
  %s5 = inlined_call_operand.vmem [shape: bf16[16,128], index: 5, kind: output, shape index: {}]
  %s6 = sld [smem:[#allocation0]]
  $region42: #{speaker_classifier_pallas.1} parent=0
    _
  %s8 = ssub.s32 1, %s6
  %s9 = scalar_select 0, %s8, %s6
  $region1: #{speaker_classifier_pallas.1} parent=0
    #allocation2 [shape = 'u8[32768]{0}', space=vmem, size = 0x8000, scoped, tag = 'input window, operand 0, single buffered']
    #allocation3 [shape = 's32[1]{0}', space=sflag, size = 0x4, scoped, tag = 'scoped memory for speaker_classifier_pallas.1']
    #allocation4 [shape = 'u8[262144]{0}', space=vmem, size = 0x40000, scoped, tag = 'input window, operand 1, single buffered']
    #allocation5 [shape = 's32[1]{0}', space=sflag, size = 0x4, scoped, tag = 'scoped memory for speaker_classifier_pallas.1']
    #allocation6 [shape = 'u8[65536]{0}', space=vmem, size = 0x10000, scoped, tag = 'input window, operand 3, single buffered']
    %10 = vsyncpa [#allocation3], 0
    %11 = vsyncpa [#allocation5], 0
    // Predicated region
    $region2: #{speaker_classifier_pallas.1} parent=1 // pred_check
      _
    $region3: #{speaker_classifier_pallas.1} parent=1 // pred_check_branch
      %13 = sbr.rel (0) target = $region5
    $region4: #{speaker_classifier_pallas.1} parent=1 // pred_region
      %15 = vsyncadd [#allocation3], 0
      %s16 = sshll.u32 %s0, 4
      %s17 = int_to_ptr.hbm [resolvable:$true] %s16
      %s18 = sshll.u32 [#allocation2], 4
      %s19 = int_to_ptr.vmem [resolvable:$true] %s18
      %24 = dma.hbm_to_vmem [thread:$0]  %s17, 1024, %s19, [#allocation3], 512, 512, 32
    $region5: #{speaker_classifier_pallas.1} parent=1 // pred_fallthru
      _
    // Predicated region
    $region6: #{speaker_classifier_pallas.1} parent=1 // pred_check
      _
    $region7: #{speaker_classifier_pallas.1} parent=1 // pred_check_branch
      %26 = sbr.rel (0) target = $region9
    $region8: #{speaker_classifier_pallas.1} parent=1 // pred_region
      %28 = vsyncadd [#allocation5], 0
      %s29 = sshll.u32 %s1, 4
      %s30 = int_to_ptr.hbm [resolvable:$true] %s29
      %s31 = sshll.u32 [#allocation4], 4
      %s32 = int_to_ptr.vmem [resolvable:$true] %s31
      %37 = dma.hbm_to_vmem [thread:$0]  %s30, 8192, %s32, [#allocation5], 128, 128, 8
    $region9: #{speaker_classifier_pallas.1} parent=1 // pred_fallthru
      _
    // Predicated region
    $region10: #{speaker_classifier_pallas.1} parent=1 // pred_check
      _
    $region11: #{speaker_classifier_pallas.1} parent=1 // pred_check_branch
      %39 = sbr.rel (0) target = $region13
    $region12: #{speaker_classifier_pallas.1} parent=1 // pred_region
      _
    $region13: #{speaker_classifier_pallas.1} parent=1 // pred_fallthru
      _
    // Predicated region
    $region14: #{speaker_classifier_pallas.1} parent=1 // pred_check
      _
    $region15: #{speaker_classifier_pallas.1} parent=1 // pred_check_branch
      %41 = sbr.rel (0) target = $region17
    $region16: #{speaker_classifier_pallas.1} parent=1 // pred_region
      %43 = vsyncadd [#allocation5], 0
      %s44 = sshll.u32 %s3, 4
      %s45 = int_to_ptr.hbm [resolvable:$true] %s44
      %s46 = sshll.u32 [#allocation6], 4
      %s47 = int_to_ptr.vmem [resolvable:$true] %s46
      %52 = dma.hbm_to_vmem [thread:$0]  %s45, 2048, %s47, [#allocation5], 64, 64, 4
    $region17: #{speaker_classifier_pallas.1} parent=1 // pred_fallthru
      _
    // Predicated region
    $region18: #{speaker_classifier_pallas.1} parent=1 // pred_check
      _
    $region19: #{speaker_classifier_pallas.1} parent=1 // pred_check_branch
      %54 = sbr.rel (0) target = $region21
    $region20: #{speaker_classifier_pallas.1} parent=1 // pred_region
      _
    $region21: #{speaker_classifier_pallas.1} parent=1 // pred_fallthru
      _
    // Predicated region
    $region22: #{speaker_classifier_pallas.1} parent=1 // pred_check
      _
    $region23: #{speaker_classifier_pallas.1} parent=1 // pred_check_branch
      %56 = sbr.rel (0) target = $region25
    $region24: #{speaker_classifier_pallas.1} parent=1 // pred_region
      %58 = dma.done [#allocation3], 1024
    $region25: #{speaker_classifier_pallas.1} parent=1 // pred_fallthru
      _
    // Predicated region
    $region26: #{speaker_classifier_pallas.1} parent=1 // pred_check
      _
    $region27: #{speaker_classifier_pallas.1} parent=1 // pred_check_branch
      %60 = sbr.rel (0) target = $region29
    $region28: #{speaker_classifier_pallas.1} parent=1 // pred_region
      %62 = dma.done [#allocation5], 8192
    $region29: #{speaker_classifier_pallas.1} parent=1 // pred_fallthru
      _
    // Predicated region
    $region30: #{speaker_classifier_pallas.1} parent=1 // pred_check
      _
    $region31: #{speaker_classifier_pallas.1} parent=1 // pred_check_branch
      %64 = sbr.rel (0) target = $region33
    $region32: #{speaker_classifier_pallas.1} parent=1 // pred_region
      %66 = dma.done [#allocation5], 2048
    $region33: #{speaker_classifier_pallas.1} parent=1 // pred_fallthru
      _
    %v67 = vld [vmem:[#allocation2] sm:$0xff]
    %v68 = vld [vmem:[#allocation2 + $0x8] sm:$0xff]
    %v69 = vld [vmem:[#allocation2 + $0x10] sm:$0xff]
    %v70 = vld [vmem:[#allocation2 + $0x18] sm:$0xff]
    %v71 = vld [vmem:[#allocation2 + $0x20] sm:$0xff]
    %v72 = vld [vmem:[#allocation2 + $0x28] sm:$0xff]
    %v73 = vld [vmem:[#allocation2 + $0x30] sm:$0xff]
    %v74 = vld [vmem:[#allocation2 + $0x38] sm:$0xff]
    %v75 = vpack.c.bf16 %v71, %v67
    %v76 = vpack.c.bf16 %v72, %v68
    %v77 = vpack.c.bf16 %v73, %v69
    %v78 = vpack.c.bf16 %v74, %v70
    %v79 = vld [vmem:[#allocation4] sm:$0xff]
    %v80 = vld [vmem:[#allocation4 + $0x8] sm:$0xff]
    %v81 = vld [vmem:[#allocation4 + $0x10] sm:$0xff]
    %v82 = vld [vmem:[#allocation4 + $0x18] sm:$0xff]
    %v83 = vld [vmem:[#allocation4 + $0x20] sm:$0xff]
    %v84 = vld [vmem:[#allocation4 + $0x28] sm:$0xff]
    %v85 = vld [vmem:[#allocation4 + $0x30] sm:$0xff]
    %v86 = vld [vmem:[#allocation4 + $0x38] sm:$0xff]
    %v87 = vld [vmem:[#allocation4 + $0x40] sm:$0xff]
    %v88 = vld [vmem:[#allocation4 + $0x48] sm:$0xff]
    %v89 = vld [vmem:[#allocation4 + $0x50] sm:$0xff]
    %v90 = vld [vmem:[#allocation4 + $0x58] sm:$0xff]
    %v91 = vld [vmem:[#allocation4 + $0x60] sm:$0xff]
    %v92 = vld [vmem:[#allocation4 + $0x68] sm:$0xff]
    %v93 = vld [vmem:[#allocation4 + $0x70] sm:$0xff]
    %v94 = vld [vmem:[#allocation4 + $0x78] sm:$0xff]
    %v95 = vld [vmem:[#allocation4 + $0x80] sm:$0xff]
    %v96 = vld [vmem:[#allocation4 + $0x88] sm:$0xff]
    %v97 = vld [vmem:[#allocation4 + $0x90] sm:$0xff]
    %v98 = vld [vmem:[#allocation4 + $0x98] sm:$0xff]
    %v99 = vld [vmem:[#allocation4 + $0xa0] sm:$0xff]
    %v100 = vld [vmem:[#allocation4 + $0xa8] sm:$0xff]
    %v101 = vld [vmem:[#allocation4 + $0xb0] sm:$0xff]
    %v102 = vld [vmem:[#allocation4 + $0xb8] sm:$0xff]
    %v103 = vld [vmem:[#allocation4 + $0xc0] sm:$0xff]
    %v104 = vld [vmem:[#allocation4 + $0xc8] sm:$0xff]
    %v105 = vld [vmem:[#allocation4 + $0xd0] sm:$0xff]
    %v106 = vld [vmem:[#allocation4 + $0xd8] sm:$0xff]
    %v107 = vld [vmem:[#allocation4 + $0xe0] sm:$0xff]
    %v108 = vld [vmem:[#allocation4 + $0xe8] sm:$0xff]
    %v109 = vld [vmem:[#allocation4 + $0xf0] sm:$0xff]
    %v110 = vld [vmem:[#allocation4 + $0xf8] sm:$0xff]
    %v111 = vld [vmem:[#allocation4 + $0x100] sm:$0xff]
    %v112 = vld [vmem:[#allocation4 + $0x108] sm:$0xff]
    %v113 = vld [vmem:[#allocation4 + $0x110] sm:$0xff]
    %v114 = vld [vmem:[#allocation4 + $0x118] sm:$0xff]
    %v115 = vld [vmem:[#allocation4 + $0x120] sm:$0xff]
    %v116 = vld [vmem:[#allocation4 + $0x128] sm:$0xff]
    %v117 = vld [vmem:[#allocation4 + $0x130] sm:$0xff]
    %v118 = vld [vmem:[#allocation4 + $0x138] sm:$0xff]
    %v119 = vld [vmem:[#allocation4 + $0x140] sm:$0xff]
    %v120 = vld [vmem:[#allocation4 + $0x148] sm:$0xff]
    %v121 = vld [vmem:[#allocation4 + $0x150] sm:$0xff]
    %v122 = vld [vmem:[#allocation4 + $0x158] sm:$0xff]
    %v123 = vld [vmem:[#allocation4 + $0x160] sm:$0xff]
    %v124 = vld [vmem:[#allocation4 + $0x168] sm:$0xff]
    %v125 = vld [vmem:[#allocation4 + $0x170] sm:$0xff]
    %v126 = vld [vmem:[#allocation4 + $0x178] sm:$0xff]
    %v127 = vld [vmem:[#allocation4 + $0x180] sm:$0xff]
    %v128 = vld [vmem:[#allocation4 + $0x188] sm:$0xff]
    %v129 = vld [vmem:[#allocation4 + $0x190] sm:$0xff]
    %v130 = vld [vmem:[#allocation4 + $0x198] sm:$0xff]
    %v131 = vld [vmem:[#allocation4 + $0x1a0] sm:$0xff]
    %v132 = vld [vmem:[#allocation4 + $0x1a8] sm:$0xff]
    %v133 = vld [vmem:[#allocation4 + $0x1b0] sm:$0xff]
    %v134 = vld [vmem:[#allocation4 + $0x1b8] sm:$0xff]
    %v135 = vld [vmem:[#allocation4 + $0x1c0] sm:$0xff]
    %v136 = vld [vmem:[#allocation4 + $0x1c8] sm:$0xff]
    %v137 = vld [vmem:[#allocation4 + $0x1d0] sm:$0xff]
    %v138 = vld [vmem:[#allocation4 + $0x1d8] sm:$0xff]
    %v139 = vld [vmem:[#allocation4 + $0x1e0] sm:$0xff]
    %v140 = vld [vmem:[#allocation4 + $0x1e8] sm:$0xff]
    %v141 = vld [vmem:[#allocation4 + $0x1f0] sm:$0xff]
    %v142 = vld [vmem:[#allocation4 + $0x1f8] sm:$0xff]
    %v143 = vld [vmem:[%s2] sm:$0x3]
    %v145 = vperm.slane %v143, 0
    %v146 = vperm.slane %v143, 1
    %v213 = vunpack.c.l.b16 %v79
    %v214 = vunpack.c.h.b16 %v79
    %v215 = vunpack.c.l.b16 %v80
    %v216 = vunpack.c.h.b16 %v80
    %v217 = vunpack.c.l.b16 %v81
    %v218 = vunpack.c.h.b16 %v81
    %v219 = vunpack.c.l.b16 %v82
    %v220 = vunpack.c.h.b16 %v82
    %v221 = vunpack.c.l.b16 %v83
    %v222 = vunpack.c.h.b16 %v83
    %v223 = vunpack.c.l.b16 %v84
    %v224 = vunpack.c.h.b16 %v84
    %v225 = vunpack.c.l.b16 %v85
    %v226 = vunpack.c.h.b16 %v85
    %v227 = vunpack.c.l.b16 %v86
    %v228 = vunpack.c.h.b16 %v86
    %v229 = vunpack.c.l.b16 %v87
    %v230 = vunpack.c.h.b16 %v87
    %v231 = vunpack.c.l.b16 %v88
    %v232 = vunpack.c.h.b16 %v88
    %v233 = vunpack.c.l.b16 %v89
    %v234 = vunpack.c.h.b16 %v89
    %v235 = vunpack.c.l.b16 %v90
    %v236 = vunpack.c.h.b16 %v90
    %v237 = vunpack.c.l.b16 %v91
    %v238 = vunpack.c.h.b16 %v91
    %v239 = vunpack.c.l.b16 %v92
    %v240 = vunpack.c.h.b16 %v92
    %v241 = vunpack.c.l.b16 %v93
    %v242 = vunpack.c.h.b16 %v93
    %v243 = vunpack.c.l.b16 %v94
    %v244 = vunpack.c.h.b16 %v94
    %v245 = vunpack.c.l.b16 %v95
    %v246 = vunpack.c.h.b16 %v95
    %v247 = vunpack.c.l.b16 %v96
    %v248 = vunpack.c.h.b16 %v96
    %v249 = vunpack.c.l.b16 %v97
    %v250 = vunpack.c.h.b16 %v97
    %v251 = vunpack.c.l.b16 %v98
    %v252 = vunpack.c.h.b16 %v98
    %v253 = vunpack.c.l.b16 %v99
    %v254 = vunpack.c.h.b16 %v99
    %v255 = vunpack.c.l.b16 %v100
    %v256 = vunpack.c.h.b16 %v100
    %v257 = vunpack.c.l.b16 %v101
    %v258 = vunpack.c.h.b16 %v101
    %v259 = vunpack.c.l.b16 %v102
    %v260 = vunpack.c.h.b16 %v102
    %v261 = vunpack.c.l.b16 %v103
    %v262 = vunpack.c.h.b16 %v103
    %v263 = vunpack.c.l.b16 %v104
    %v264 = vunpack.c.h.b16 %v104
    %v265 = vunpack.c.l.b16 %v105
    %v266 = vunpack.c.h.b16 %v105
    %v267 = vunpack.c.l.b16 %v106
    %v268 = vunpack.c.h.b16 %v106
    %v269 = vunpack.c.l.b16 %v107
    %v270 = vunpack.c.h.b16 %v107
    %v271 = vunpack.c.l.b16 %v108
    %v272 = vunpack.c.h.b16 %v108
    %v273 = vunpack.c.l.b16 %v109
    %v274 = vunpack.c.h.b16 %v109
    %v275 = vunpack.c.l.b16 %v110
    %v276 = vunpack.c.h.b16 %v110
    %v277 = vunpack.c.l.b16 %v111
    %v278 = vunpack.c.h.b16 %v111
    %v279 = vunpack.c.l.b16 %v112
    %v280 = vunpack.c.h.b16 %v112
    %v281 = vunpack.c.l.b16 %v113
    %v282 = vunpack.c.h.b16 %v113
    %v283 = vunpack.c.l.b16 %v114
    %v284 = vunpack.c.h.b16 %v114
    %v285 = vunpack.c.l.b16 %v115
    %v286 = vunpack.c.h.b16 %v115
    %v287 = vunpack.c.l.b16 %v116
    %v288 = vunpack.c.h.b16 %v116
    %v289 = vunpack.c.l.b16 %v117
    %v290 = vunpack.c.h.b16 %v117
    %v291 = vunpack.c.l.b16 %v118
    %v292 = vunpack.c.h.b16 %v118
    %v293 = vunpack.c.l.b16 %v119
    %v294 = vunpack.c.h.b16 %v119
    %v295 = vunpack.c.l.b16 %v120
    %v296 = vunpack.c.h.b16 %v120
    %v297 = vunpack.c.l.b16 %v121
    %v298 = vunpack.c.h.b16 %v121
    %v299 = vunpack.c.l.b16 %v122
    %v300 = vunpack.c.h.b16 %v122
    %v301 = vunpack.c.l.b16 %v123
    %v302 = vunpack.c.h.b16 %v123
    %v303 = vunpack.c.l.b16 %v124
    %v304 = vunpack.c.h.b16 %v124
    %v305 = vunpack.c.l.b16 %v125
    %v306 = vunpack.c.h.b16 %v125
    %v307 = vunpack.c.l.b16 %v126
    %v308 = vunpack.c.h.b16 %v126
    %v309 = vunpack.c.l.b16 %v127
    %v310 = vunpack.c.h.b16 %v127
    %v311 = vunpack.c.l.b16 %v128
    %v312 = vunpack.c.h.b16 %v128
    %v313 = vunpack.c.l.b16 %v129
    %v314 = vunpack.c.h.b16 %v129
    %v315 = vunpack.c.l.b16 %v130
    %v316 = vunpack.c.h.b16 %v130
    %v317 = vunpack.c.l.b16 %v131
    %v318 = vunpack.c.h.b16 %v131
    %v319 = vunpack.c.l.b16 %v132
    %v320 = vunpack.c.h.b16 %v132
    %v321 = vunpack.c.l.b16 %v133
    %v322 = vunpack.c.h.b16 %v133
    %v323 = vunpack.c.l.b16 %v134
    %v324 = vunpack.c.h.b16 %v134
    %v325 = vunpack.c.l.b16 %v135
    %v326 = vunpack.c.h.b16 %v135
    %v327 = vunpack.c.l.b16 %v136
    %v328 = vunpack.c.h.b16 %v136
    %v329 = vunpack.c.l.b16 %v137
    %v330 = vunpack.c.h.b16 %v137
    %v331 = vunpack.c.l.b16 %v138
    %v332 = vunpack.c.h.b16 %v138
    %v333 = vunpack.c.l.b16 %v139
    %v334 = vunpack.c.h.b16 %v139
    %v335 = vunpack.c.l.b16 %v140
    %v336 = vunpack.c.h.b16 %v140
    %v337 = vunpack.c.l.b16 %v141
    %v338 = vunpack.c.h.b16 %v141
    %v339 = vunpack.c.l.b16 %v142
    %v340 = vunpack.c.h.b16 %v142
    %v341 = vpack.c.b16 %v215, %v213
    %v342 = vpack.c.b16 %v216, %v214
    %v343 = vpack.c.b16 %v219, %v217
    %v344 = vpack.c.b16 %v220, %v218
    %v345 = vpack.c.b16 %v223, %v221
    %v346 = vpack.c.b16 %v224, %v222
    %v347 = vpack.c.b16 %v227, %v225
    %v348 = vpack.c.b16 %v228, %v226
    %v349 = vpack.c.b16 %v231, %v229
    %v350 = vpack.c.b16 %v232, %v230
    %v351 = vpack.c.b16 %v235, %v233
    %v352 = vpack.c.b16 %v236, %v234
    %v353 = vpack.c.b16 %v239, %v237
    %v354 = vpack.c.b16 %v240, %v238
    %v355 = vpack.c.b16 %v243, %v241
    %v356 = vpack.c.b16 %v244, %v242
    %v357 = vpack.c.b16 %v247, %v245
    %v358 = vpack.c.b16 %v248, %v246
    %v359 = vpack.c.b16 %v251, %v249
    %v360 = vpack.c.b16 %v252, %v250
    %v361 = vpack.c.b16 %v255, %v253
    %v362 = vpack.c.b16 %v256, %v254
    %v363 = vpack.c.b16 %v259, %v257
    %v364 = vpack.c.b16 %v260, %v258
    %v365 = vpack.c.b16 %v263, %v261
    %v366 = vpack.c.b16 %v264, %v262
    %v367 = vpack.c.b16 %v267, %v265
    %v368 = vpack.c.b16 %v268, %v266
    %v369 = vpack.c.b16 %v271, %v269
    %v370 = vpack.c.b16 %v272, %v270
    %v371 = vpack.c.b16 %v275, %v273
    %v372 = vpack.c.b16 %v276, %v274
    %v373 = vpack.c.b16 %v279, %v277
    %v374 = vpack.c.b16 %v280, %v278
    %v375 = vpack.c.b16 %v283, %v281
    %v376 = vpack.c.b16 %v284, %v282
    %v377 = vpack.c.b16 %v287, %v285
    %v378 = vpack.c.b16 %v288, %v286
    %v379 = vpack.c.b16 %v291, %v289
    %v380 = vpack.c.b16 %v292, %v290
    %v381 = vpack.c.b16 %v295, %v293
    %v382 = vpack.c.b16 %v296, %v294
    %v383 = vpack.c.b16 %v299, %v297
    %v384 = vpack.c.b16 %v300, %v298
    %v385 = vpack.c.b16 %v303, %v301
    %v386 = vpack.c.b16 %v304, %v302
    %v387 = vpack.c.b16 %v307, %v305
    %v388 = vpack.c.b16 %v308, %v306
    %v389 = vpack.c.b16 %v311, %v309
    %v390 = vpack.c.b16 %v312, %v310
    %v391 = vpack.c.b16 %v315, %v313
    %v392 = vpack.c.b16 %v316, %v314
    %v393 = vpack.c.b16 %v319, %v317
    %v394 = vpack.c.b16 %v320, %v318
    %v395 = vpack.c.b16 %v323, %v321
    %v396 = vpack.c.b16 %v324, %v322
    %v397 = vpack.c.b16 %v327, %v325
    %v398 = vpack.c.b16 %v328, %v326
    %v399 = vpack.c.b16 %v331, %v329
    %v400 = vpack.c.b16 %v332, %v330
    %v401 = vpack.c.b16 %v335, %v333
    %v402 = vpack.c.b16 %v336, %v334
    %v403 = vpack.c.b16 %v339, %v337
    %v404 = vpack.c.b16 %v340, %v338
    %469 = vmatpush.bf16.msra.mxu0 %v355
    %470 = vmatpush.bf16.msra.mxu0 %v353
    %471 = vmatpush.bf16.msra.mxu0 %v351
    %472 = vmatpush.bf16.msra.mxu0 %v349
    %473 = vmatpush.bf16.msra.mxu0 %v347
    %474 = vmatpush.bf16.msra.mxu0 %v345
    %475 = vmatpush.bf16.msra.mxu0 %v343
    %476 = vmatpush.bf16.msra.mxu0 %v341
    %477 = vmatmul.bf16.gmra.mxu0 %v75
    %v478 = vpop.f32.mrf.mxu0
    %v479 = vadd.f32 %v145, %v478
    %v480 = vpop.f32.mrf.mxu0
    %v481 = vadd.f32 %v145, %v480
    %482 = vdwg.mxu0
    %483 = vmatpush.bf16.msra.mxu0 %v371
    %484 = vmatpush.bf16.msra.mxu0 %v369
    %485 = vmatpush.bf16.msra.mxu0 %v367
    %486 = vmatpush.bf16.msra.mxu0 %v365
    %487 = vmatpush.bf16.msra.mxu0 %v363
    %488 = vmatpush.bf16.msra.mxu0 %v361
    %489 = vmatpush.bf16.msra.mxu0 %v359
    %490 = vmatpush.bf16.msra.mxu0 %v357
    %491 = vmatmul.bf16.gmra.mxu0 %v76
    %v492 = vpop.f32.mrf.mxu0
    %v493 = vadd.f32 %v479, %v492
    %v494 = vpop.f32.mrf.mxu0
    %v495 = vadd.f32 %v481, %v494
    %496 = vdwg.mxu0
    %497 = vmatpush.bf16.msra.mxu0 %v387
    %498 = vmatpush.bf16.msra.mxu0 %v385
    %499 = vmatpush.bf16.msra.mxu0 %v383
    %500 = vmatpush.bf16.msra.mxu0 %v381
    %501 = vmatpush.bf16.msra.mxu0 %v379
    %502 = vmatpush.bf16.msra.mxu0 %v377
    %503 = vmatpush.bf16.msra.mxu0 %v375
    %504 = vmatpush.bf16.msra.mxu0 %v373
    %505 = vmatmul.bf16.gmra.mxu0 %v77
    %v506 = vpop.f32.mrf.mxu0
    %v507 = vadd.f32 %v493, %v506
    %v508 = vpop.f32.mrf.mxu0
    %v509 = vadd.f32 %v495, %v508
    %510 = vdwg.mxu0
    %511 = vmatpush.bf16.msra.mxu0 %v403
    %512 = vmatpush.bf16.msra.mxu0 %v401
    %513 = vmatpush.bf16.msra.mxu0 %v399
    %514 = vmatpush.bf16.msra.mxu0 %v397
    %515 = vmatpush.bf16.msra.mxu0 %v395
    %516 = vmatpush.bf16.msra.mxu0 %v393
    %517 = vmatpush.bf16.msra.mxu0 %v391
    %518 = vmatpush.bf16.msra.mxu0 %v389
    %519 = vmatmul.bf16.gmra.mxu0 %v78
    %v520 = vpop.f32.mrf.mxu0
    %v521 = vadd.f32 %v507, %v520
    %v522 = vpop.f32.mrf.mxu0
    %v523 = vadd.f32 %v509, %v522
    %524 = vdwg.mxu0
    %525 = vmatpush.bf16.msra.mxu0 %v356
    %526 = vmatpush.bf16.msra.mxu0 %v354
    %527 = vmatpush.bf16.msra.mxu0 %v352
    %528 = vmatpush.bf16.msra.mxu0 %v350
    %529 = vmatpush.bf16.msra.mxu0 %v348
    %530 = vmatpush.bf16.msra.mxu0 %v346
    %531 = vmatpush.bf16.msra.mxu0 %v344
    %532 = vmatpush.bf16.msra.mxu0 %v342
    %533 = vmatmul.bf16.gmra.mxu0 %v75
    %v534 = vpop.f32.mrf.mxu0
    %v535 = vadd.f32 %v146, %v534
    %v536 = vpop.f32.mrf.mxu0
    %v537 = vadd.f32 %v146, %v536
    %538 = vdwg.mxu0
    %539 = vmatpush.bf16.msra.mxu0 %v372
    %540 = vmatpush.bf16.msra.mxu0 %v370
    %541 = vmatpush.bf16.msra.mxu0 %v368
    %542 = vmatpush.bf16.msra.mxu0 %v366
    %543 = vmatpush.bf16.msra.mxu0 %v364
    %544 = vmatpush.bf16.msra.mxu0 %v362
    %545 = vmatpush.bf16.msra.mxu0 %v360
    %546 = vmatpush.bf16.msra.mxu0 %v358
    %547 = vmatmul.bf16.gmra.mxu0 %v76
    %v548 = vpop.f32.mrf.mxu0
    %v549 = vadd.f32 %v535, %v548
    %v550 = vpop.f32.mrf.mxu0
    %v551 = vadd.f32 %v537, %v550
    %552 = vdwg.mxu0
    %553 = vmatpush.bf16.msra.mxu0 %v388
    %554 = vmatpush.bf16.msra.mxu0 %v386
    %555 = vmatpush.bf16.msra.mxu0 %v384
    %556 = vmatpush.bf16.msra.mxu0 %v382
    %557 = vmatpush.bf16.msra.mxu0 %v380
    %558 = vmatpush.bf16.msra.mxu0 %v378
    %559 = vmatpush.bf16.msra.mxu0 %v376
    %560 = vmatpush.bf16.msra.mxu0 %v374
    %561 = vmatmul.bf16.gmra.mxu0 %v77
    %v562 = vpop.f32.mrf.mxu0
    %v563 = vadd.f32 %v549, %v562
    %v564 = vpop.f32.mrf.mxu0
    %v565 = vadd.f32 %v551, %v564
    %566 = vdwg.mxu0
    %567 = vmatpush.bf16.msra.mxu0 %v404
    %568 = vmatpush.bf16.msra.mxu0 %v402
    %569 = vmatpush.bf16.msra.mxu0 %v400
    %570 = vmatpush.bf16.msra.mxu0 %v398
    %571 = vmatpush.bf16.msra.mxu0 %v396
    %572 = vmatpush.bf16.msra.mxu0 %v394
    %573 = vmatpush.bf16.msra.mxu0 %v392
    %574 = vmatpush.bf16.msra.mxu0 %v390
    %575 = vmatmul.bf16.gmra.mxu0 %v78
    %v576 = vpop.f32.mrf.mxu0
    %v577 = vadd.f32 %v563, %v576
    %v578 = vpop.f32.mrf.mxu0
    %v579 = vadd.f32 %v565, %v578
    %580 = vdwg.mxu0
    %v581 = vmax.f32 %v521, 0.0
    %v582 = vmax.f32 %v577, 0.0
    %v583 = vmax.f32 %v523, 0.0
    %v584 = vmax.f32 %v579, 0.0
    %v585 = vpack.c.bf16 %v583, %v581
    %v586 = vpack.c.bf16 %v584, %v582
    %v587 = vld [vmem:[#allocation6] sm:$0xf]
    %v588 = vld [vmem:[#allocation6 + $0x4] sm:$0xf]
    %v589 = vld [vmem:[#allocation6 + $0x8] sm:$0xf]
    %v590 = vld [vmem:[#allocation6 + $0xc] sm:$0xf]
    %v591 = vld [vmem:[#allocation6 + $0x10] sm:$0xf]
    %v592 = vld [vmem:[#allocation6 + $0x14] sm:$0xf]
    %v593 = vld [vmem:[#allocation6 + $0x18] sm:$0xf]
    %v594 = vld [vmem:[#allocation6 + $0x1c] sm:$0xf]
    %v595 = vld [vmem:[#allocation6 + $0x20] sm:$0xf]
    %v596 = vld [vmem:[#allocation6 + $0x24] sm:$0xf]
    %v597 = vld [vmem:[#allocation6 + $0x28] sm:$0xf]
    %v598 = vld [vmem:[#allocation6 + $0x2c] sm:$0xf]
    %v599 = vld [vmem:[#allocation6 + $0x30] sm:$0xf]
    %v600 = vld [vmem:[#allocation6 + $0x34] sm:$0xf]
    %v601 = vld [vmem:[#allocation6 + $0x38] sm:$0xf]
    %v602 = vld [vmem:[#allocation6 + $0x3c] sm:$0xf]
    %v603 = vld [vmem:[#allocation6 + $0x40] sm:$0xf]
    %v604 = vld [vmem:[#allocation6 + $0x44] sm:$0xf]
    %v605 = vld [vmem:[#allocation6 + $0x48] sm:$0xf]
    %v606 = vld [vmem:[#allocation6 + $0x4c] sm:$0xf]
    %v607 = vld [vmem:[#allocation6 + $0x50] sm:$0xf]
    %v608 = vld [vmem:[#allocation6 + $0x54] sm:$0xf]
    %v609 = vld [vmem:[#allocation6 + $0x58] sm:$0xf]
    %v610 = vld [vmem:[#allocation6 + $0x5c] sm:$0xf]
    %v611 = vld [vmem:[#allocation6 + $0x60] sm:$0xf]
    %v612 = vld [vmem:[#allocation6 + $0x64] sm:$0xf]
    %v613 = vld [vmem:[#allocation6 + $0x68] sm:$0xf]
    %v614 = vld [vmem:[#allocation6 + $0x6c] sm:$0xf]
    %v615 = vld [vmem:[#allocation6 + $0x70] sm:$0xf]
    %v616 = vld [vmem:[#allocation6 + $0x74] sm:$0xf]
    %v617 = vld [vmem:[#allocation6 + $0x78] sm:$0xf]
    %v618 = vld [vmem:[#allocation6 + $0x7c] sm:$0xf]
    %v619 = vld [vmem:[%s4] sm:$0x1]
    %v621 = vperm.slane %v619, 0
    %v655 = vunpack.c.l.b16 %v587
    %v656 = vunpack.c.l.b16 %v588
    %v657 = vunpack.c.l.b16 %v589
    %v658 = vunpack.c.l.b16 %v590
    %v659 = vunpack.c.l.b16 %v591
    %v660 = vunpack.c.l.b16 %v592
    %v661 = vunpack.c.l.b16 %v593
    %v662 = vunpack.c.l.b16 %v594
    %v663 = vunpack.c.l.b16 %v595
    %v664 = vunpack.c.l.b16 %v596
    %v665 = vunpack.c.l.b16 %v597
    %v666 = vunpack.c.l.b16 %v598
    %v667 = vunpack.c.l.b16 %v599
    %v668 = vunpack.c.l.b16 %v600
    %v669 = vunpack.c.l.b16 %v601
    %v670 = vunpack.c.l.b16 %v602
    %v671 = vunpack.c.l.b16 %v603
    %v672 = vunpack.c.l.b16 %v604
    %v673 = vunpack.c.l.b16 %v605
    %v674 = vunpack.c.l.b16 %v606
    %v675 = vunpack.c.l.b16 %v607
    %v676 = vunpack.c.l.b16 %v608
    %v677 = vunpack.c.l.b16 %v609
    %v678 = vunpack.c.l.b16 %v610
    %v679 = vunpack.c.l.b16 %v611
    %v680 = vunpack.c.l.b16 %v612
    %v681 = vunpack.c.l.b16 %v613
    %v682 = vunpack.c.l.b16 %v614
    %v683 = vunpack.c.l.b16 %v615
    %v684 = vunpack.c.l.b16 %v616
    %v685 = vunpack.c.l.b16 %v617
    %v686 = vunpack.c.l.b16 %v618
    %v687 = vpack.c.b16 %v656, %v655
    %v688 = vpack.c.b16 %v658, %v657
    %v689 = vpack.c.b16 %v660, %v659
    %v690 = vpack.c.b16 %v662, %v661
    %v691 = vpack.c.b16 %v664, %v663
    %v692 = vpack.c.b16 %v666, %v665
    %v693 = vpack.c.b16 %v668, %v667
    %v694 = vpack.c.b16 %v670, %v669
    %v695 = vpack.c.b16 %v672, %v671
    %v696 = vpack.c.b16 %v674, %v673
    %v697 = vpack.c.b16 %v676, %v675
    %v698 = vpack.c.b16 %v678, %v677
    %v699 = vpack.c.b16 %v680, %v679
    %v700 = vpack.c.b16 %v682, %v681
    %v701 = vpack.c.b16 %v684, %v683
    %v702 = vpack.c.b16 %v686, %v685
    %719 = vmatpush.bf16.msra.mxu0 %v694
    %720 = vmatpush.bf16.msra.mxu0 %v693
    %721 = vmatpush.bf16.msra.mxu0 %v692
    %722 = vmatpush.bf16.msra.mxu0 %v691
    %723 = vmatpush.bf16.msra.mxu0 %v690
    %724 = vmatpush.bf16.msra.mxu0 %v689
    %725 = vmatpush.bf16.msra.mxu0 %v688
    %726 = vmatpush.bf16.msra.mxu0 %v687
    %727 = vmatmul.bf16.gmra.mxu0 %v585
    %v728 = vpop.f32.mrf.mxu0
    %v729 = vadd.f32 %v621, %v728
    %v730 = vpop.f32.mrf.mxu0
    %v731 = vadd.f32 %v621, %v730
    %732 = vdwg.mxu0
    %733 = vmatpush.bf16.msra.mxu0 %v702
    %734 = vmatpush.bf16.msra.mxu0 %v701
    %735 = vmatpush.bf16.msra.mxu0 %v700
    %736 = vmatpush.bf16.msra.mxu0 %v699
    %737 = vmatpush.bf16.msra.mxu0 %v698
    %738 = vmatpush.bf16.msra.mxu0 %v697
    %739 = vmatpush.bf16.msra.mxu0 %v696
    %740 = vmatpush.bf16.msra.mxu0 %v695
    %741 = vmatmul.bf16.gmra.mxu0 %v586
    %v742 = vpop.f32.mrf.mxu0
    %v743 = vadd.f32 %v729, %v742
    %v744 = vpop.f32.mrf.mxu0
    %v745 = vadd.f32 %v731, %v744
    %746 = vdwg.mxu0
    %v747 = vpack.c.bf16 %v743, %v743
    %v748 = vpack.c.bf16 %v745, %v745
    %749 = vst [vmem:[%s5] sm:$0xf] %v747
    %750 = vst [vmem:[%s5 + $0x4] sm:$0xf] %v748
    // Predicated region
    $region34: #{speaker_classifier_pallas.1} parent=1 // pred_check
      _
    $region35: #{speaker_classifier_pallas.1} parent=1 // pred_check_branch
      %752 = sbr.rel (0) target = $region37
    $region36: #{speaker_classifier_pallas.1} parent=1 // pred_region
      _
    $region37: #{speaker_classifier_pallas.1} parent=1 // pred_fallthru
      _
    // Predicated region
    $region38: #{speaker_classifier_pallas.1} parent=1 // pred_check
      _
    $region39: #{speaker_classifier_pallas.1} parent=1 // pred_check_branch
      %754 = sbr.rel (0) target = $region41
    $region40: #{speaker_classifier_pallas.1} parent=1 // pred_region
      _
    $region41: #{speaker_classifier_pallas.1} parent=1 // pred_fallthru
      _
    %755 = vsyncpa [#allocation3], 1
    %756 = vsyncpa [#allocation5], 1

</llo_original>
